<compile_context>
chip_gen: v7x
topology: tpu7x:2x2x1
jax: 0.10.0
libtpu: 0.0.40
codegen_flags: <defaults>
</compile_context>

<pallas_src>
import functools
import math

import jax
import jax.numpy as jnp
from jax import lax
from jax.experimental import pallas as pl
from jax.experimental.pallas import tpu as pltpu

_EPS = 1e-10
_LOG_2PI = math.log(2.0 * math.pi)
_VMEM_LIMIT = 32 * 1024 * 1024   # explicit budget; safe on v5e/v6e (128 MiB) and v7x (64 MiB)


def _softplus(x):
    # numerically stable softplus
    return jnp.maximum(x, 0.0) + jnp.log1p(jnp.exp(-jnp.abs(x)))


def _pick_row_tile(rows, target=256):
    """Largest row tile <= target that divides `rows` and is sublane aligned
    (multiple of 8), falling back to the whole array (always legal)."""
    if rows <= target:
        return rows
    for rt in range(target, 7, -1):
        if rows % rt == 0 and rt % 8 == 0:
            return rt
    return rows


# ----------------------- kernel 1: batched MLP encoder ------------------------

def _encoder_kernel(x_ref, w1_ref, b1_ref, w2_ref, b2_ref, mu_ref, var_ref):
    # x streamed in bf16; MXU matmuls with f32 accumulation.
    h1 = jnp.tanh(jnp.dot(x_ref[...], w1_ref[...],
                          preferred_element_type=jnp.float32) + b1_ref[...])
    head = jnp.dot(h1.astype(jnp.bfloat16), w2_ref[...],
                   preferred_element_type=jnp.float32) + b2_ref[...]
    L = mu_ref.shape[-1]
    mu = head[:, :L]                       # fused [hid, 2L] head, static lane split
    std = _softplus(head[:, L:])
    mu_ref[...] = mu
    var_ref[...] = std * std


def encoder_mlp(x_rows, w1, b1, w2, b2, latent_dims):
    M, d_in = x_rows.shape
    hid = w1.shape[1]
    L = latent_dims
    rt = _pick_row_tile(M)
    grid = (M // rt,)

    grid_spec = pltpu.PrefetchScalarGridSpec(
        num_scalar_prefetch=0,
        grid=grid,
        in_specs=[
            pl.BlockSpec((rt, d_in), lambda i: (i, 0)),
            pl.BlockSpec((d_in, hid), lambda i: (0, 0)),
            pl.BlockSpec((1, hid), lambda i: (0, 0)),
            pl.BlockSpec((hid, 2 * L), lambda i: (0, 0)),
            pl.BlockSpec((1, 2 * L), lambda i: (0, 0)),
        ],
        out_specs=(
            pl.BlockSpec((rt, L), lambda i: (i, 0)),
            pl.BlockSpec((rt, L), lambda i: (i, 0)),
        ),
    )
    out_shape = (jax.ShapeDtypeStruct((M, L), jnp.float32),
                 jax.ShapeDtypeStruct((M, L), jnp.float32))
    return pl.pallas_call(
        _encoder_kernel,
        out_shape=out_shape,
        grid_spec=grid_spec,
        compiler_params=pltpu.CompilerParams(
            dimension_semantics=("parallel",),
            vmem_limit_bytes=_VMEM_LIMIT),
    )(x_rows, w1, b1, w2, b2)


# --------------- kernel 2: OU Kalman filter + RTS smoother + loglik ---------------
# State layout: (T, V*L) -- every time step is one lane-dense row of V*L channels.

def _ou_smoother_kernel(mu_ref, var_ref, dt_ref, ms_ref, ps_ref, lp_ref,
                        a_buf, a2_buf, q_buf, *, ell, sig2, unroll):
    T, _ = mu_ref.shape

    # Transition coeffs a_t, a_t^2, process noise q_t for every step, computed
    # vectorised BEFORE the serial recursion (one EUP exp pass; nothing but
    # mul/add + one exact divide sits on the per-step dependent chain).
    a_all = jnp.exp(dt_ref[...] * (-1.0 / ell))          # (T, V*L)
    a2_all = a_all * a_all
    a_buf[...] = a_all
    a2_buf[...] = a2_all
    q_buf[...] = sig2 * (1.0 - a2_all)

    # ---- t = 0 update against the stationary prior N(0, sig2) ----
    y0 = mu_ref[0:1, :]
    r0 = var_ref[0:1, :]
    s0 = sig2 + r0
    k0 = sig2 / s0                                        # exact reciprocal (recursive)
    mf0 = k0 * y0
    pf0 = jnp.maximum((1.0 - k0) * sig2, _EPS)
    ms_ref[0:1, :] = mf0
    ps_ref[0:1, :] = pf0

    # ---- forward Kalman filter; filtered moments staged in ms/ps refs ----
    def fwd(t, carry):
        m_prev, p_prev = carry
        a_t = a_buf[pl.ds(t, 1), :]
        a2_t = a2_buf[pl.ds(t, 1), :]
        q_t = q_buf[pl.ds(t, 1), :]
        m_pred = a_t * m_prev
        p_pred = a2_t * p_prev + q_t
        y = mu_ref[pl.ds(t, 1), :]
        r = var_ref[pl.ds(t, 1), :]
        k = p_pred / (p_pred + r)                         # exact: no compounding error
        m_f = m_pred + k * (y - m_pred)
        p_f = jnp.maximum((1.0 - k) * p_pred, _EPS)
        ms_ref[pl.ds(t, 1), :] = m_f
        ps_ref[pl.ds(t, 1), :] = p_f
        return m_f, p_f

    m_last, p_last = lax.fori_loop(1, T, fwd, (mf0, pf0), unroll=unroll)

    # ---- marginal log-likelihood: deferred, fully vectorised, no concatenates
    #      (t=0 term added separately; t>=1 terms from shifted static slices) ----
    mu_all = mu_ref[...]
    var_all = var_ref[...]
    mf_prev = ms_ref[0:T - 1, :]
    pf_prev = ps_ref[0:T - 1, :]
    a_tl = a_buf[1:T, :]
    a2_tl = a2_buf[1:T, :]
    q_tl = q_buf[1:T, :]
    mp_tl = a_tl * mf_prev
    pp_tl = a2_tl * pf_prev + q_tl
    s_tl = pp_tl + var_all[1:T, :]
    res_tl = mu_all[1:T, :] - mp_tl
    lp_tl = jnp.log(s_tl) + res_tl * res_tl * pl.reciprocal(s_tl, approx=True)
    lp0 = jnp.log(s0) + y0 * y0 * pl.reciprocal(s0, approx=True)
    lp_ref[...] = -0.5 * (lp0 + jnp.sum(lp_tl, axis=0, keepdims=True)
                          + T * _LOG_2PI)

    # ---- backward RTS smoother, overwriting the staged filtered moments ----
    def bwd(i, carry):
        m_next, p_next = carry
        t = T - 2 - i
        a_n = a_buf[pl.ds(t + 1, 1), :]
        a2_n = a2_buf[pl.ds(t + 1, 1), :]
        q_n = q_buf[pl.ds(t + 1, 1), :]
        m_f = ms_ref[pl.ds(t, 1), :]
        p_f = ps_ref[pl.ds(t, 1), :]
        p_pred_n = a2_n * p_f + q_n
        g = p_f * a_n / p_pred_n                          # exact reciprocal (recursive)
        m_s = m_f + g * (m_next - a_n * m_f)
        p_s = jnp.maximum(p_f + g * g * (p_next - p_pred_n), _EPS)
        ms_ref[pl.ds(t, 1), :] = m_s
        ps_ref[pl.ds(t, 1), :] = p_s
        return m_s, p_s

    lax.fori_loop(0, T - 1, bwd, (m_last, p_last), unroll=unroll)


def ou_smoother(mu_t, var_t, dt_t, *, ell, sig2):
    T, VL = mu_t.shape
    unroll = int(min(8, max(T - 1, 1)))                   # bounded unroll (no code blowup)
    grid_spec = pltpu.PrefetchScalarGridSpec(
        num_scalar_prefetch=0,
        grid=(1,),
        in_specs=[
            pl.BlockSpec((T, VL), lambda i: (0, 0)),
            pl.BlockSpec((T, VL), lambda i: (0, 0)),
            pl.BlockSpec((T, VL), lambda i: (0, 0)),
        ],
        out_specs=(
            pl.BlockSpec((T, VL), lambda i: (0, 0)),
            pl.BlockSpec((T, VL), lambda i: (0, 0)),
            pl.BlockSpec((1, VL), lambda i: (0, 0)),
        ),
        scratch_shapes=[pltpu.VMEM((T, VL), jnp.float32) for _ in range(3)],
    )
    out_shape = (jax.ShapeDtypeStruct((T, VL), jnp.float32),
                 jax.ShapeDtypeStruct((T, VL), jnp.float32),
                 jax.ShapeDtypeStruct((1, VL), jnp.float32))
    return pl.pallas_call(
        functools.partial(_ou_smoother_kernel, ell=ell, sig2=sig2, unroll=unroll),
        out_shape=out_shape,
        grid_spec=grid_spec,
        compiler_params=pltpu.CompilerParams(
            dimension_semantics=("arbitrary",),
            vmem_limit_bytes=_VMEM_LIMIT),
    )(mu_t, var_t, dt_t)


# --------------- kernel 3: fused reparameterised sample + MLP decoder ---------------

def _sample_decode_kernel(m_ref, p_ref, eps_ref, w1_ref, b1_ref,
                          w2_ref, b2_ref, out_ref):
    z = m_ref[...] + jnp.sqrt(p_ref[...]) * eps_ref[...]
    h = jnp.tanh(jnp.dot(z.astype(jnp.bfloat16), w1_ref[...],
                         preferred_element_type=jnp.float32) + b1_ref[...])
    logits = jnp.dot(h.astype(jnp.bfloat16), w2_ref[...],
                     preferred_element_type=jnp.float32) + b2_ref[...]
    out_ref[...] = jax.nn.sigmoid(logits)


def sample_decode(m_rows, p_rows, eps_rows, w1, b1, w2, b2):
    m_total, L = eps_rows.shape          # S * V * T rows (sample axis collapsed)
    m_rep = m_rows.shape[0]              # V * T rows (shared across samples)
    hid = w1.shape[1]
    d_out = w2.shape[1]

    rt = _pick_row_tile(m_rep)
    if rt % 8 != 0 and rt != m_total:
        # TODO(synk): V*T not sublane-aligned; materialize the tiny sample
        # broadcast of m/P instead of tiling it through the index_map.
        reps = m_total // m_rep
        m_rows = jnp.tile(m_rows, (reps, 1))
        p_rows = jnp.tile(p_rows, (reps, 1))
        m_rep = m_total
        rt = m_total
    n_rep_tiles = m_rep // rt
    grid = (m_total // rt,)

    grid_spec = pltpu.PrefetchScalarGridSpec(
        num_scalar_prefetch=0,
        grid=grid,
        in_specs=[
            pl.BlockSpec((rt, L), lambda i: (i % n_rep_tiles, 0)),   # m (reused per sample)
            pl.BlockSpec((rt, L), lambda i: (i % n_rep_tiles, 0)),   # P (reused per sample)
            pl.BlockSpec((rt, L), lambda i: (i, 0)),                 # eps per row tile
            pl.BlockSpec((L, hid), lambda i: (0, 0)),
            pl.BlockSpec((1, hid), lambda i: (0, 0)),
            pl.BlockSpec((hid, d_out), lambda i: (0, 0)),
            pl.BlockSpec((1, d_out), lambda i: (0, 0)),
        ],
        out_specs=pl.BlockSpec((rt, d_out), lambda i: (i, 0)),        # lane-dense output
    )
    return pl.pallas_call(
        _sample_decode_kernel,
        out_shape=jax.ShapeDtypeStruct((m_total, d_out), jnp.float32),
        grid_spec=grid_spec,
        compiler_params=pltpu.CompilerParams(
            dimension_semantics=("parallel",),
            vmem_limit_bytes=_VMEM_LIMIT),
    )(m_rows, p_rows, eps_rows, w1, b1, w2, b2)


# --------------------------------- model glue ---------------------------------

def init_params(key, d_in, hid, L):
    ks = jax.random.split(key, 4)

    def w(k, shape):
        return (jax.random.normal(k, shape, jnp.float32)
                / jnp.sqrt(jnp.float32(shape[0])))

    return dict(
        L=L, ell=1.0, sig2=1.0,
        enc_w1=w(ks[0], (d_in, hid)), enc_b1=jnp.zeros((hid,), jnp.float32),
        enc_w2=w(ks[1], (hid, 2 * L)), enc_b2=jnp.zeros((2 * L,), jnp.float32),
        dec_w1=w(ks[2], (L, hid)),    dec_b1=jnp.zeros((hid,), jnp.float32),
        dec_w2=w(ks[3], (hid, d_in)), dec_b2=jnp.zeros((d_in,), jnp.float32),
    )


def mgpvae_forward(params, vid_batch, t_batch, num_samples=1, key=None):
    if key is None:
        key = jax.random.PRNGKey(0)
    V, T = vid_batch.shape[:2]
    frame_shape = vid_batch.shape[2:]
    d_in = math.prod(frame_shape)        # static python int
    L = params["L"]
    hid = params["enc_w1"].shape[1]
    bf16 = jnp.bfloat16

    # ---- kernel 1: encoder over all V*T frames, streamed as bf16 ----
    x_rows = vid_batch.reshape(V * T, d_in).astype(bf16)
    mu_rows, var_rows = encoder_mlp(
        x_rows,
        params["enc_w1"].astype(bf16),
        params["enc_b1"].reshape(1, hid).astype(jnp.float32),
        params["enc_w2"].astype(bf16),
        params["enc_b2"].reshape(1, 2 * L).astype(jnp.float32),
        L)
    qnet_mus = mu_rows.reshape(V, T, L)
    qnet_vars = var_rows.reshape(V, T, L)

    # ---- kernel 2: SSM in lane-dense (T, V*L) layout ----
    mu_t = mu_rows.reshape(V, T, L).transpose(1, 0, 2).reshape(T, V * L)
    var_t = var_rows.reshape(V, T, L).transpose(1, 0, 2).reshape(T, V * L)
    # dt_nonzero = torch.diff(t_batch, dim=-2); t=0 uses the stationary prior,
    # so a zero is prepended (its transition coefficient is never used).
    dt_nonzero = jnp.diff(t_batch.astype(jnp.float32)[..., 0], axis=-1)       # (V, T-1)
    dt_vt = jnp.concatenate([jnp.zeros((V, 1), jnp.float32), dt_nonzero], axis=1)
    dt_t = jnp.broadcast_to(dt_vt.T[:, :, None], (T, V, L)).reshape(T, V * L)

    ms_t, ps_t, lp = ou_smoother(mu_t, var_t, dt_t,
                                 ell=float(params["ell"]),
                                 sig2=float(params["sig2"]))
    m_ss_Z = ms_t.reshape(T, V, L).transpose(1, 0, 2)    # (V, T, L) == PyTorch m_ss_Z.mT
    P_ss_Z = ps_t.reshape(T, V, L).transpose(1, 0, 2)
    sum_log_p = lp.reshape(V, L)

    # ---- kernel 3: reparameterised sampling + decoder (bernoulli head) ----
    eps = jax.random.normal(key, (num_samples * V * T, L), jnp.float32)
    rec = sample_decode(
        m_ss_Z.reshape(V * T, L), P_ss_Z.reshape(V * T, L), eps,
        params["dec_w1"].astype(bf16),
        params["dec_b1"].reshape(1, hid).astype(jnp.float32),
        params["dec_w2"].astype(bf16),
        params["dec_b2"].reshape(1, d_in).astype(jnp.float32))
    rec_vid = rec.reshape(num_samples, V, T, *frame_shape)

    return qnet_mus, qnet_vars, m_ss_Z, P_ss_Z, rec_vid, sum_log_p


# ------------------------------------ main ------------------------------------

if __name__ == "__main__":
    key = jax.random.PRNGKey(0)
    kv, kt, kp, ke = jax.random.split(key, 4)

    # V chosen so V*L = 128 (lane-dense SSM state) and V*T = 128 encoder rows.
    v, T, C, H, W = 16, 8, 1, 16, 16
    L, HID = 8, 32

    vid_batch = jax.nn.sigmoid(jax.random.normal(kv, (v, T, C, H, W), jnp.float32))
    t_batch = jnp.cumsum(
        jax.random.uniform(kt, (v, T, 1), jnp.float32, 0.1, 1.0), axis=-2)

    params = init_params(kp, C * H * W, HID, L)

    outs = mgpvae_forward(params, vid_batch, t_batch, num_samples=2, key=ke)
    outs = jax.block_until_ready(outs)

    qnet_mus, qnet_vars, m_ss_Z, P_ss_Z, rec_vid, sum_log_p = outs
    assert qnet_mus.shape == (v, T, L)
    assert qnet_vars.shape == (v, T, L)
    assert m_ss_Z.shape == (v, T, L)
    assert P_ss_Z.shape == (v, T, L)
    assert rec_vid.shape == (2, v, T, C, H, W)
    assert sum_log_p.shape == (v, L)
    assert bool(jnp.all(jnp.isfinite(rec_vid)))
    assert bool(jnp.all(jnp.isfinite(sum_log_p)))
    assert bool(jnp.all(P_ss_Z > 0.0))

    print("KERNEL_OK")
</pallas_src>

<mosaic_0001>
module attributes {stable_mosaic.version = 11 : i64} {
  func.func @_encoder_kernel(%arg0: i32, %arg1: memref<128x256xbf16, #tpu.memory_space<vmem>>, %arg2: memref<256x32xbf16, #tpu.memory_space<vmem>>, %arg3: memref<1x32xf32, #tpu.memory_space<vmem>>, %arg4: memref<32x16xbf16, #tpu.memory_space<vmem>>, %arg5: memref<1x16xf32, #tpu.memory_space<vmem>>, %arg6: memref<128x8xf32, #tpu.memory_space<vmem>>, %arg7: memref<128x8xf32, #tpu.memory_space<vmem>>) attributes {dimension_semantics = [#tpu.dimension_semantics<parallel>], iteration_bounds = array<i64: 1>, scalar_prefetch = 0 : i64, scratch_operands = 0 : i64, tpu.core_type = #tpu.core_type<tc>, window_params = [{transform_indices = @transform_0, window_bounds = array<i64: 128, 256>}, {pipeline_mode = #tpu.pipeline_mode<synchronous>, transform_indices = @transform_1, window_bounds = array<i64: 256, 32>}, {pipeline_mode = #tpu.pipeline_mode<synchronous>, transform_indices = @transform_2, window_bounds = array<i64: 1, 32>}, {pipeline_mode = #tpu.pipeline_mode<synchronous>, transform_indices = @transform_3, window_bounds = array<i64: 32, 16>}, {pipeline_mode = #tpu.pipeline_mode<synchronous>, transform_indices = @transform_4, window_bounds = array<i64: 1, 16>}, {transform_indices = @transform_5, window_bounds = array<i64: 128, 8>}, {transform_indices = @transform_6, window_bounds = array<i64: 128, 8>}]} {
    %c0 = arith.constant 0 : index
    %c0_0 = arith.constant 0 : index
    %0 = vector.load %arg1[%c0, %c0_0] : memref<128x256xbf16, #tpu.memory_space<vmem>>, vector<128x256xbf16>
    %c0_1 = arith.constant 0 : index
    %c0_2 = arith.constant 0 : index
    %1 = vector.load %arg2[%c0_1, %c0_2] : memref<256x32xbf16, #tpu.memory_space<vmem>>, vector<256x32xbf16>
    %cst = arith.constant dense<0.000000e+00> : vector<128x32xf32>
    %2 = tpu.matmul %0, %1, %cst {dimension_numbers = #tpu.dot_dimension_numbers<[1], [0], [0], [1], [0, 0, 1, 1], [], []>} : vector<128x256xbf16>, vector<256x32xbf16>, vector<128x32xf32> -> vector<128x32xf32>
    %c0_3 = arith.constant 0 : index
    %c0_4 = arith.constant 0 : index
    %3 = vector.load %arg3[%c0_3, %c0_4] : memref<1x32xf32, #tpu.memory_space<vmem>>, vector<1x32xf32>
    %4 = vector.broadcast %3 : vector<1x32xf32> to vector<128x32xf32>
    %5 = arith.addf %2, %4 : vector<128x32xf32>
    %6 = math.tanh %5 : vector<128x32xf32>
    %7 = arith.truncf %6 : vector<128x32xf32> to vector<128x32xbf16>
    %c0_5 = arith.constant 0 : index
    %c0_6 = arith.constant 0 : index
    %8 = vector.load %arg4[%c0_5, %c0_6] : memref<32x16xbf16, #tpu.memory_space<vmem>>, vector<32x16xbf16>
    %cst_7 = arith.constant dense<0.000000e+00> : vector<128x16xf32>
    %9 = tpu.matmul %7, %8, %cst_7 {dimension_numbers = #tpu.dot_dimension_numbers<[1], [0], [0], [1], [0, 0, 1, 1], [], []>} : vector<128x32xbf16>, vector<32x16xbf16>, vector<128x16xf32> -> vector<128x16xf32>
    %c0_8 = arith.constant 0 : index
    %c0_9 = arith.constant 0 : index
    %10 = vector.load %arg5[%c0_8, %c0_9] : memref<1x16xf32, #tpu.memory_space<vmem>>, vector<1x16xf32>
    %11 = vector.broadcast %10 : vector<1x16xf32> to vector<128x16xf32>
    %12 = arith.addf %9, %11 : vector<128x16xf32>
    %13 = vector.extract_strided_slice %12 {offsets = [0, 0], sizes = [128, 8], strides = [1, 1]} : vector<128x16xf32> to vector<128x8xf32>
    %14 = vector.extract_strided_slice %12 {offsets = [0, 8], sizes = [128, 8], strides = [1, 1]} : vector<128x16xf32> to vector<128x8xf32>
    %cst_10 = arith.constant 0.000000e+00 : f32
    %15 = vector.broadcast %cst_10 : f32 to vector<128x8xf32>
    %16 = arith.maximumf %14, %15 : vector<128x8xf32>
    %17 = math.absf %14 : vector<128x8xf32>
    %cst_11 = arith.constant 0.000000e+00 : f32
    %18 = vector.broadcast %cst_11 : f32 to vector<128x8xf32>
    %19 = arith.subf %18, %17 : vector<128x8xf32>
    %20 = math.exp %19 : vector<128x8xf32>
    %21 = math.log1p %20 : vector<128x8xf32>
    %22 = arith.addf %16, %21 : vector<128x8xf32>
    %c0_12 = arith.constant 0 : index
    %c0_13 = arith.constant 0 : index
    %23 = vector.load %arg6[%c0_12, %c0_13] : memref<128x8xf32, #tpu.memory_space<vmem>>, vector<128x8xf32>
    tpu.vector_store %arg6[%c0_12, %c0_13], %13 {strides = array<i32>} : memref<128x8xf32, #tpu.memory_space<vmem>>, vector<128x8xf32>,
    %24 = arith.mulf %22, %22 : vector<128x8xf32>
    %c0_14 = arith.constant 0 : index
    %c0_15 = arith.constant 0 : index
    %25 = vector.load %arg7[%c0_14, %c0_15] : memref<128x8xf32, #tpu.memory_space<vmem>>, vector<128x8xf32>
    tpu.vector_store %arg7[%c0_14, %c0_15], %24 {strides = array<i32>} : memref<128x8xf32, #tpu.memory_space<vmem>>, vector<128x8xf32>,
    return
  }
  func.func @transform_0(%arg0: i32) -> (i32, i32) {
    %c0_i32 = arith.constant 0 : i32
    %c0_i32_0 = arith.constant 0 : i32
    return %arg0, %c0_i32 : i32, i32
  }
  func.func @transform_1(%arg0: i32) -> (i32, i32) {
    %c0_i32 = arith.constant 0 : i32
    %c0_i32_0 = arith.constant 0 : i32
    %c0_i32_1 = arith.constant 0 : i32
    return %c0_i32, %c0_i32_0 : i32, i32
  }
  func.func @transform_2(%arg0: i32) -> (i32, i32) {
    %c0_i32 = arith.constant 0 : i32
    %c0_i32_0 = arith.constant 0 : i32
    %c0_i32_1 = arith.constant 0 : i32
    return %c0_i32, %c0_i32_0 : i32, i32
  }
  func.func @transform_3(%arg0: i32) -> (i32, i32) {
    %c0_i32 = arith.constant 0 : i32
    %c0_i32_0 = arith.constant 0 : i32
    %c0_i32_1 = arith.constant 0 : i32
    return %c0_i32, %c0_i32_0 : i32, i32
  }
  func.func @transform_4(%arg0: i32) -> (i32, i32) {
    %c0_i32 = arith.constant 0 : i32
    %c0_i32_0 = arith.constant 0 : i32
    %c0_i32_1 = arith.constant 0 : i32
    return %c0_i32, %c0_i32_0 : i32, i32
  }
  func.func @transform_5(%arg0: i32) -> (i32, i32) {
    %c0_i32 = arith.constant 0 : i32
    %c0_i32_0 = arith.constant 0 : i32
    return %arg0, %c0_i32 : i32, i32
  }
  func.func @transform_6(%arg0: i32) -> (i32, i32) {
    %c0_i32 = arith.constant 0 : i32
    %c0_i32_0 = arith.constant 0 : i32
    return %arg0, %c0_i32 : i32, i32
  }
}

</mosaic_0001>

<llo_original>
// kernel: tpu_custom_call.1
$region0: #{tpu_custom_call.1}
  #allocation0 [shape = 'u32[]', space=smem, size = 0x4, offset = 0x4, fixed_abs, tag = 'smem constant byte address 0x4 - core index']
  #allocation1 [shape = 'u32[144,128]{1,0:T(1,128)}', space=vmem, size = 0x12000, scoped, tag = 'internal scratch']
  %s0 = inlined_call_operand.vmem [shape: bf16[128,256], index: 0, kind: input, shape index: {}]
  %s1 = inlined_call_operand.vmem [shape: bf16[256,32], index: 1, kind: input, shape index: {}]
  %s2 = inlined_call_operand.vmem [shape: f32[1,32], index: 2, kind: input, shape index: {}]
  %s3 = inlined_call_operand.vmem [shape: bf16[32,16], index: 3, kind: input, shape index: {}]
  %s4 = inlined_call_operand.vmem [shape: f32[1,16], index: 4, kind: input, shape index: {}]
  %s5 = inlined_call_operand.vmem [shape: f32[128,8], index: 5, kind: output, shape index: {0}]
  %s6 = inlined_call_operand.vmem [shape: f32[128,8], index: 6, kind: output, shape index: {1}]
  %7 = xla_tuple %s5, %s6
  %s8 = sld [smem:[#allocation0]]
  $region38: #{tpu_custom_call.1} parent=0
    _
  %s10 = ssub.s32 1, %s8
  %s11 = scalar_select 0, %s10, %s8
  // Predicated region
  $region2: #{tpu_custom_call.1} parent=0 // pred_check
    _
  $region3: #{tpu_custom_call.1} parent=0 // pred_check_branch
    %13 = sbr.rel (0) target = $region5
  $region4: #{tpu_custom_call.1} parent=0 // pred_region
    _
  $region5: #{tpu_custom_call.1} parent=0 // pred_fallthru
    _
  // Predicated region
  $region6: #{tpu_custom_call.1} parent=0 // pred_check
    _
  $region7: #{tpu_custom_call.1} parent=0 // pred_check_branch
    %15 = sbr.rel (0) target = $region9
  $region8: #{tpu_custom_call.1} parent=0 // pred_region
    _
  $region9: #{tpu_custom_call.1} parent=0 // pred_fallthru
    _
  // Predicated region
  $region10: #{tpu_custom_call.1} parent=0 // pred_check
    _
  $region11: #{tpu_custom_call.1} parent=0 // pred_check_branch
    %17 = sbr.rel (0) target = $region13
  $region12: #{tpu_custom_call.1} parent=0 // pred_region
    _
  $region13: #{tpu_custom_call.1} parent=0 // pred_fallthru
    _
  // Predicated region
  $region14: #{tpu_custom_call.1} parent=0 // pred_check
    _
  $region15: #{tpu_custom_call.1} parent=0 // pred_check_branch
    %19 = sbr.rel (0) target = $region17
  $region16: #{tpu_custom_call.1} parent=0 // pred_region
    _
  $region17: #{tpu_custom_call.1} parent=0 // pred_fallthru
    _
  // Predicated region
  $region18: #{tpu_custom_call.1} parent=0 // pred_check
    _
  $region19: #{tpu_custom_call.1} parent=0 // pred_check_branch
    %21 = sbr.rel (0) target = $region21
  $region20: #{tpu_custom_call.1} parent=0 // pred_region
    _
  $region21: #{tpu_custom_call.1} parent=0 // pred_fallthru
    _
  %v23 = vld [vmem:[%s0] sm:$0xff]
  %v24 = vld [vmem:[%s0 + $0x8] sm:$0xff]
  %v25 = vld [vmem:[%s0 + $0x10] sm:$0xff]
  %v26 = vld [vmem:[%s0 + $0x18] sm:$0xff]
  %v27 = vld [vmem:[%s0 + $0x20] sm:$0xff]
  %v28 = vld [vmem:[%s0 + $0x28] sm:$0xff]
  %v29 = vld [vmem:[%s0 + $0x30] sm:$0xff]
  %v30 = vld [vmem:[%s0 + $0x38] sm:$0xff]
  %v31 = vld [vmem:[%s0 + $0x40] sm:$0xff]
  %v32 = vld [vmem:[%s0 + $0x48] sm:$0xff]
  %v33 = vld [vmem:[%s0 + $0x50] sm:$0xff]
  %v34 = vld [vmem:[%s0 + $0x58] sm:$0xff]
  %v35 = vld [vmem:[%s0 + $0x60] sm:$0xff]
  %v36 = vld [vmem:[%s0 + $0x68] sm:$0xff]
  %v37 = vld [vmem:[%s0 + $0x70] sm:$0xff]
  %v38 = vld [vmem:[%s0 + $0x78] sm:$0xff]
  %v39 = vld [vmem:[%s1] sm:$0xf]
  %v40 = vld [vmem:[%s1 + $0x4] sm:$0xf]
  %v41 = vld [vmem:[%s1 + $0x8] sm:$0xf]
  %v42 = vld [vmem:[%s1 + $0xc] sm:$0xf]
  %v43 = vld [vmem:[%s1 + $0x10] sm:$0xf]
  %v44 = vld [vmem:[%s1 + $0x14] sm:$0xf]
  %v45 = vld [vmem:[%s1 + $0x18] sm:$0xf]
  %v46 = vld [vmem:[%s1 + $0x1c] sm:$0xf]
  %v47 = vld [vmem:[%s1 + $0x20] sm:$0xf]
  %v48 = vld [vmem:[%s1 + $0x24] sm:$0xf]
  %v49 = vld [vmem:[%s1 + $0x28] sm:$0xf]
  %v50 = vld [vmem:[%s1 + $0x2c] sm:$0xf]
  %v51 = vld [vmem:[%s1 + $0x30] sm:$0xf]
  %v52 = vld [vmem:[%s1 + $0x34] sm:$0xf]
  %v53 = vld [vmem:[%s1 + $0x38] sm:$0xf]
  %v54 = vld [vmem:[%s1 + $0x3c] sm:$0xf]
  %v55 = vld [vmem:[%s1 + $0x40] sm:$0xf]
  %v56 = vld [vmem:[%s1 + $0x44] sm:$0xf]
  %v57 = vld [vmem:[%s1 + $0x48] sm:$0xf]
  %v58 = vld [vmem:[%s1 + $0x4c] sm:$0xf]
  %v59 = vld [vmem:[%s1 + $0x50] sm:$0xf]
  %v60 = vld [vmem:[%s1 + $0x54] sm:$0xf]
  %v61 = vld [vmem:[%s1 + $0x58] sm:$0xf]
  %v62 = vld [vmem:[%s1 + $0x5c] sm:$0xf]
  %v63 = vld [vmem:[%s1 + $0x60] sm:$0xf]
  %v64 = vld [vmem:[%s1 + $0x64] sm:$0xf]
  %v65 = vld [vmem:[%s1 + $0x68] sm:$0xf]
  %v66 = vld [vmem:[%s1 + $0x6c] sm:$0xf]
  %v67 = vld [vmem:[%s1 + $0x70] sm:$0xf]
  %v68 = vld [vmem:[%s1 + $0x74] sm:$0xf]
  %v69 = vld [vmem:[%s1 + $0x78] sm:$0xf]
  %v70 = vld [vmem:[%s1 + $0x7c] sm:$0xf]
  %v71 = vld [vmem:[%s2] sm:$0x1]
  %v73 = vlaneseq
  %v74 = vshrl.u32 %v73, 7
  %v75 = vsub.s32 0, %v74
  %v76 = vrot.slane %v71, %v75
  %v94 = vunpack.c.l.b16 %v23
  %v95 = vunpack.c.h.b16 %v23
  %v96 = vunpack.c.l.b16 %v24
  %v97 = vunpack.c.h.b16 %v24
  %v98 = vunpack.c.l.b16 %v25
  %v99 = vunpack.c.h.b16 %v25
  %v100 = vunpack.c.l.b16 %v26
  %v101 = vunpack.c.h.b16 %v26
  %v102 = vunpack.c.l.b16 %v27
  %v103 = vunpack.c.h.b16 %v27
  %v104 = vunpack.c.l.b16 %v28
  %v105 = vunpack.c.h.b16 %v28
  %v106 = vunpack.c.l.b16 %v29
  %v107 = vunpack.c.h.b16 %v29
  %v108 = vunpack.c.l.b16 %v30
  %v109 = vunpack.c.h.b16 %v30
  %v110 = vunpack.c.l.b16 %v31
  %v111 = vunpack.c.h.b16 %v31
  %v112 = vunpack.c.l.b16 %v32
  %v113 = vunpack.c.h.b16 %v32
  %v114 = vunpack.c.l.b16 %v33
  %v115 = vunpack.c.h.b16 %v33
  %v116 = vunpack.c.l.b16 %v34
  %v117 = vunpack.c.h.b16 %v34
  %v118 = vunpack.c.l.b16 %v35
  %v119 = vunpack.c.h.b16 %v35
  %v120 = vunpack.c.l.b16 %v36
  %v121 = vunpack.c.h.b16 %v36
  %v122 = vunpack.c.l.b16 %v37
  %v123 = vunpack.c.h.b16 %v37
  %v124 = vunpack.c.l.b16 %v38
  %v125 = vunpack.c.h.b16 %v38
  %v126 = vpack.c.b16 %v96, %v94
  %v127 = vpack.c.b16 %v97, %v95
  %v128 = vpack.c.b16 %v100, %v98
  %v129 = vpack.c.b16 %v101, %v99
  %v130 = vpack.c.b16 %v104, %v102
  %v131 = vpack.c.b16 %v105, %v103
  %v132 = vpack.c.b16 %v108, %v106
  %v133 = vpack.c.b16 %v109, %v107
  %v134 = vpack.c.b16 %v112, %v110
  %v135 = vpack.c.b16 %v113, %v111
  %v136 = vpack.c.b16 %v116, %v114
  %v137 = vpack.c.b16 %v117, %v115
  %v138 = vpack.c.b16 %v120, %v118
  %v139 = vpack.c.b16 %v121, %v119
  %v140 = vpack.c.b16 %v124, %v122
  %v141 = vpack.c.b16 %v125, %v123
  %v190 = vunpack.c.l.b16 %v39
  %v191 = vunpack.c.l.b16 %v40
  %v192 = vunpack.c.l.b16 %v41
  %v193 = vunpack.c.l.b16 %v42
  %v194 = vunpack.c.l.b16 %v43
  %v195 = vunpack.c.l.b16 %v44
  %v196 = vunpack.c.l.b16 %v45
  %v197 = vunpack.c.l.b16 %v46
  %v198 = vunpack.c.l.b16 %v47
  %v199 = vunpack.c.l.b16 %v48
  %v200 = vunpack.c.l.b16 %v49
  %v201 = vunpack.c.l.b16 %v50
  %v202 = vunpack.c.l.b16 %v51
  %v203 = vunpack.c.l.b16 %v52
  %v204 = vunpack.c.l.b16 %v53
  %v205 = vunpack.c.l.b16 %v54
  %v206 = vunpack.c.l.b16 %v55
  %v207 = vunpack.c.l.b16 %v56
  %v208 = vunpack.c.l.b16 %v57
  %v209 = vunpack.c.l.b16 %v58
  %v210 = vunpack.c.l.b16 %v59
  %v211 = vunpack.c.l.b16 %v60
  %v212 = vunpack.c.l.b16 %v61
  %v213 = vunpack.c.l.b16 %v62
  %v214 = vunpack.c.l.b16 %v63
  %v215 = vunpack.c.l.b16 %v64
  %v216 = vunpack.c.l.b16 %v65
  %v217 = vunpack.c.l.b16 %v66
  %v218 = vunpack.c.l.b16 %v67
  %v219 = vunpack.c.l.b16 %v68
  %v220 = vunpack.c.l.b16 %v69
  %v221 = vunpack.c.l.b16 %v70
  %v222 = vpack.c.b16 %v191, %v190
  %v223 = vpack.c.b16 %v193, %v192
  %v224 = vpack.c.b16 %v195, %v194
  %v225 = vpack.c.b16 %v197, %v196
  %v226 = vpack.c.b16 %v199, %v198
  %v227 = vpack.c.b16 %v201, %v200
  %v228 = vpack.c.b16 %v203, %v202
  %v229 = vpack.c.b16 %v205, %v204
  %v230 = vpack.c.b16 %v207, %v206
  %v231 = vpack.c.b16 %v209, %v208
  %v232 = vpack.c.b16 %v211, %v210
  %v233 = vpack.c.b16 %v213, %v212
  %v234 = vpack.c.b16 %v215, %v214
  %v235 = vpack.c.b16 %v217, %v216
  %v236 = vpack.c.b16 %v219, %v218
  %v237 = vpack.c.b16 %v221, %v220
  %254 = vmatprep.subr.bf16.mxu0 0
  %255 = vmatpush1.bf16.msra.mxu0 %v222
  %256 = vmatprep.subr.bf16.mxu0 0
  %257 = vmatpush1.bf16.msra.mxu0 %v223
  %258 = vmatprep.subr.bf16.mxu0 0
  %259 = vmatpush1.bf16.msra.mxu0 %v224
  %260 = vmatprep.subr.bf16.mxu0 0
  %261 = vmatpush1.bf16.msra.mxu0 %v225
  %262 = vmatprep.subr.bf16.mxu0 0
  %263 = vmatpush1.bf16.msra.mxu0 %v226
  %264 = vmatprep.subr.bf16.mxu0 0
  %265 = vmatpush1.bf16.msra.mxu0 %v227
  %266 = vmatprep.subr.bf16.mxu0 0
  %267 = vmatpush1.bf16.msra.mxu0 %v228
  %268 = vmatprep.subr.bf16.mxu0 0
  %269 = vmatpush1.bf16.msra.mxu0 %v229
  %270 = vmatprep.subr.bf16.mxu0 0
  %271 = vmatpush1.bf16.msra.mxu0 %v230
  %272 = vmatprep.subr.bf16.mxu0 0
  %273 = vmatpush1.bf16.msra.mxu0 %v231
  %274 = vmatprep.subr.bf16.mxu0 0
  %275 = vmatpush1.bf16.msra.mxu0 %v232
  %276 = vmatprep.subr.bf16.mxu0 0
  %277 = vmatpush1.bf16.msra.mxu0 %v233
  %278 = vmatprep.subr.bf16.mxu0 0
  %279 = vmatpush1.bf16.msra.mxu0 %v234
  %280 = vmatprep.subr.bf16.mxu0 0
  %281 = vmatpush1.bf16.msra.mxu0 %v235
  %282 = vmatprep.subr.bf16.mxu0 0
  %283 = vmatpush1.bf16.msra.mxu0 %v236
  %284 = vmatprep.subr.bf16.mxu0 0
  %285 = vmatpush1.bf16.msra.mxu0 %v237
  %286 = vmatprep.mubr.bf16.mxu0 %v127
  %287 = vmatmul.mubr.bf16.gmra.mrb[0].mxu0 %v126
  %v288 = vpop.f32.mrb[0].mxu0
  %v289 = vadd.f32 %v76, %v288
  %v290 = vpop.f32.mrb[0].mxu0
  %v291 = vpop.f32.mrb[0].mxu0
  %v292 = vadd.f32 %v76, %v291
  %v293 = vpop.f32.mrb[0].mxu0
  %294 = vmatprep.mubr.bf16.mxu0 %v129
  %295 = vmatmul.mubr.bf16.gmra.mrb[0].mxu0 %v128
  %v296 = vpop.f32.mrb[0].mxu0
  %v297 = vadd.f32 %v76, %v296
  %v298 = vpop.f32.mrb[0].mxu0
  %v299 = vpop.f32.mrb[0].mxu0
  %v300 = vadd.f32 %v76, %v299
  %v301 = vpop.f32.mrb[0].mxu0
  %302 = vmatprep.mubr.bf16.mxu0 %v131
  %303 = vmatmul.mubr.bf16.gmra.mrb[0].mxu0 %v130
  %v304 = vpop.f32.mrb[0].mxu0
  %v305 = vadd.f32 %v76, %v304
  %v306 = vpop.f32.mrb[0].mxu0
  %v307 = vpop.f32.mrb[0].mxu0
  %v308 = vadd.f32 %v76, %v307
  %v309 = vpop.f32.mrb[0].mxu0
  %310 = vmatprep.mubr.bf16.mxu0 %v133
  %311 = vmatmul.mubr.bf16.gmra.mrb[0].mxu0 %v132
  %v312 = vpop.f32.mrb[0].mxu0
  %v313 = vadd.f32 %v76, %v312
  %v314 = vpop.f32.mrb[0].mxu0
  %v315 = vpop.f32.mrb[0].mxu0
  %v316 = vadd.f32 %v76, %v315
  %v317 = vpop.f32.mrb[0].mxu0
  %318 = vmatprep.mubr.bf16.mxu0 %v135
  %319 = vmatmul.mubr.bf16.gmra.mrb[0].mxu0 %v134
  %v320 = vpop.f32.mrb[0].mxu0
  %v321 = vadd.f32 %v76, %v320
  %v322 = vpop.f32.mrb[0].mxu0
  %v323 = vpop.f32.mrb[0].mxu0
  %v324 = vadd.f32 %v76, %v323
  %v325 = vpop.f32.mrb[0].mxu0
  %326 = vmatprep.mubr.bf16.mxu0 %v137
  %327 = vmatmul.mubr.bf16.gmra.mrb[0].mxu0 %v136
  %v328 = vpop.f32.mrb[0].mxu0
  %v329 = vadd.f32 %v76, %v328
  %v330 = vpop.f32.mrb[0].mxu0
  %v331 = vpop.f32.mrb[0].mxu0
  %v332 = vadd.f32 %v76, %v331
  %v333 = vpop.f32.mrb[0].mxu0
  %334 = vmatprep.mubr.bf16.mxu0 %v139
  %335 = vmatmul.mubr.bf16.gmra.mrb[0].mxu0 %v138
  %v336 = vpop.f32.mrb[0].mxu0
  %v337 = vadd.f32 %v76, %v336
  %v338 = vpop.f32.mrb[0].mxu0
  %v339 = vpop.f32.mrb[0].mxu0
  %v340 = vadd.f32 %v76, %v339
  %v341 = vpop.f32.mrb[0].mxu0
  %342 = vmatprep.mubr.bf16.mxu0 %v141
  %343 = vmatmul.mubr.bf16.gmra.mrb[0].mxu0 %v140
  %v344 = vpop.f32.mrb[0].mxu0
  %v345 = vadd.f32 %v76, %v344
  %v346 = vpop.f32.mrb[0].mxu0
  %v347 = vpop.f32.mrb[0].mxu0
  %v348 = vadd.f32 %v76, %v347
  %v349 = vpop.f32.mrb[0].mxu0
  %350 = vdwg.mxu0
  %v351 = vtanh.pop %v289
  %v352 = vtanh.pop %v292
  %v353 = vtanh.pop %v297
  %v354 = vtanh.pop %v300
  %v355 = vtanh.pop %v305
  %v356 = vtanh.pop %v308
  %v357 = vtanh.pop %v313
  %v358 = vtanh.pop %v316
  %v359 = vtanh.pop %v321
  %v360 = vtanh.pop %v324
  %v361 = vtanh.pop %v329
  %v362 = vtanh.pop %v332
  %v363 = vtanh.pop %v337
  %v364 = vtanh.pop %v340
  %v365 = vtanh.pop %v345
  %v366 = vtanh.pop %v348
  %v367 = vpack.c.bf16 %v352, %v351
  %v368 = vpack.c.bf16 %v354, %v353
  %v369 = vpack.c.bf16 %v356, %v355
  %v370 = vpack.c.bf16 %v358, %v357
  %v371 = vpack.c.bf16 %v360, %v359
  %v372 = vpack.c.bf16 %v362, %v361
  %v373 = vpack.c.bf16 %v364, %v363
  %v374 = vpack.c.bf16 %v366, %v365
  %v375 = vld [vmem:[%s3] sm:$0xf]
  %v376 = vld [vmem:[%s3 + $0x4] sm:$0xf]
  %v377 = vld [vmem:[%s3 + $0x8] sm:$0xf]
  %v378 = vld [vmem:[%s3 + $0xc] sm:$0xf]
  %v379 = vld [vmem:[%s4] sm:$0x1]
  %v381 = vlaneseq
  %v382 = vshrl.u32 %v381, 7
  %v383 = vsub.s32 0, %v382
  %v384 = vrot.slane %v379, %v383
  %v390 = vunpack.c.l.b16 %v375
  %v391 = vunpack.c.l.b16 %v376
  %v392 = vunpack.c.l.b16 %v377
  %v393 = vunpack.c.l.b16 %v378
  %v394 = vpack.c.b16 %v391, %v390
  %v395 = vpack.c.b16 %v393, %v392
  %vm398 = vcmask 261120
  %v400 = vsel %vm398, %v367, 0
  %v403 = vsel %vm398, %v368, 0
  %v406 = vsel %vm398, %v369, 0
  %v409 = vsel %vm398, %v370, 0
  %v412 = vsel %vm398, %v371, 0
  %v415 = vsel %vm398, %v372, 0
  %v418 = vsel %vm398, %v373, 0
  %v421 = vsel %vm398, %v374, 0
  %423 = vmatprep.subr.bf16.mxu0 0
  %424 = vmatpush1.bf16.msra.mxu0 %v394
  %425 = vmatprep.subr.bf16.mxu0 0
  %426 = vmatpush1.bf16.msra.mxu0 %v395
  %427 = vmatprep.subr.bf16.mxu0 0
  %428 = vmatpush1.bf16.msra.mxu0 0
  %429 = vmatprep.subr.bf16.mxu0 0
  %430 = vmatpush1.bf16.msra.mxu0 0
  %431 = vmatprep.subr.bf16.mxu0 0
  %432 = vmatpush1.bf16.msra.mxu0 0
  %433 = vmatprep.subr.bf16.mxu0 0
  %434 = vmatpush1.bf16.msra.mxu0 0
  %435 = vmatprep.subr.bf16.mxu0 0
  %436 = vmatpush1.bf16.msra.mxu0 0
  %437 = vmatprep.subr.bf16.mxu0 0
  %438 = vmatpush1.bf16.msra.mxu0 0
  %439 = vmatprep.subr.bf16.mxu0 0
  %440 = vmatpush1.bf16.msra.mxu0 0
  %441 = vmatprep.subr.bf16.mxu0 0
  %442 = vmatpush1.bf16.msra.mxu0 0
  %443 = vmatprep.subr.bf16.mxu0 0
  %444 = vmatpush1.bf16.msra.mxu0 0
  %445 = vmatprep.subr.bf16.mxu0 0
  %446 = vmatpush1.bf16.msra.mxu0 0
  %447 = vmatprep.subr.bf16.mxu0 0
  %448 = vmatpush1.bf16.msra.mxu0 0
  %449 = vmatprep.subr.bf16.mxu0 0
  %450 = vmatpush1.bf16.msra.mxu0 0
  %451 = vmatprep.subr.bf16.mxu0 0
  %452 = vmatpush1.bf16.msra.mxu0 0
  %453 = vmatprep.subr.bf16.mxu0 0
  %454 = vmatpush1.bf16.msra.mxu0 0
  %455 = vmatprep.mubr.bf16.mxu0 0
  %456 = vmatmul.mubr.bf16.gmra.mrb[0].mxu0 %v400
  %v457 = vpop.f32.mrb[0].mxu0
  %v458 = vadd.f32 %v384, %v457
  %v459 = vpop.f32.mrb[0].mxu0
  %v460 = vpop.f32.mrb[0].mxu0
  %v461 = vadd.f32 %v384, %v460
  %v462 = vpop.f32.mrb[0].mxu0
  %463 = vmatprep.mubr.bf16.mxu0 0
  %464 = vmatmul.mubr.bf16.gmra.mrb[0].mxu0 %v403
  %v465 = vpop.f32.mrb[0].mxu0
  %v466 = vadd.f32 %v384, %v465
  %v467 = vpop.f32.mrb[0].mxu0
  %v468 = vpop.f32.mrb[0].mxu0
  %v469 = vadd.f32 %v384, %v468
  %v470 = vpop.f32.mrb[0].mxu0
  %471 = vmatprep.mubr.bf16.mxu0 0
  %472 = vmatmul.mubr.bf16.gmra.mrb[0].mxu0 %v406
  %v473 = vpop.f32.mrb[0].mxu0
  %v474 = vadd.f32 %v384, %v473
  %v475 = vpop.f32.mrb[0].mxu0
  %v476 = vpop.f32.mrb[0].mxu0
  %v477 = vadd.f32 %v384, %v476
  %v478 = vpop.f32.mrb[0].mxu0
  %479 = vmatprep.mubr.bf16.mxu0 0
  %480 = vmatmul.mubr.bf16.gmra.mrb[0].mxu0 %v409
  %v481 = vpop.f32.mrb[0].mxu0
  %v482 = vadd.f32 %v384, %v481
  %v483 = vpop.f32.mrb[0].mxu0
  %v484 = vpop.f32.mrb[0].mxu0
  %v485 = vadd.f32 %v384, %v484
  %v486 = vpop.f32.mrb[0].mxu0
  %487 = vmatprep.mubr.bf16.mxu0 0
  %488 = vmatmul.mubr.bf16.gmra.mrb[0].mxu0 %v412
  %v489 = vpop.f32.mrb[0].mxu0
  %v490 = vadd.f32 %v384, %v489
  %v491 = vpop.f32.mrb[0].mxu0
  %v492 = vpop.f32.mrb[0].mxu0
  %v493 = vadd.f32 %v384, %v492
  %v494 = vpop.f32.mrb[0].mxu0
  %495 = vmatprep.mubr.bf16.mxu0 0
  %496 = vmatmul.mubr.bf16.gmra.mrb[0].mxu0 %v415
  %v497 = vpop.f32.mrb[0].mxu0
  %v498 = vadd.f32 %v384, %v497
  %v499 = vpop.f32.mrb[0].mxu0
  %v500 = vpop.f32.mrb[0].mxu0
  %v501 = vadd.f32 %v384, %v500
  %v502 = vpop.f32.mrb[0].mxu0
  %503 = vmatprep.mubr.bf16.mxu0 0
  %504 = vmatmul.mubr.bf16.gmra.mrb[0].mxu0 %v418
  %v505 = vpop.f32.mrb[0].mxu0
  %v506 = vadd.f32 %v384, %v505
  %v507 = vpop.f32.mrb[0].mxu0
  %v508 = vpop.f32.mrb[0].mxu0
  %v509 = vadd.f32 %v384, %v508
  %v510 = vpop.f32.mrb[0].mxu0
  %511 = vmatprep.mubr.bf16.mxu0 0
  %512 = vmatmul.mubr.bf16.gmra.mrb[0].mxu0 %v421
  %v513 = vpop.f32.mrb[0].mxu0
  %v514 = vadd.f32 %v384, %v513
  %v515 = vpop.f32.mrb[0].mxu0
  %v516 = vpop.f32.mrb[0].mxu0
  %v517 = vadd.f32 %v384, %v516
  %v518 = vpop.f32.mrb[0].mxu0
  %519 = vdwg.mxu0
  %v520 = vmax.f32 %v458, 0.0
  %v521 = vmax.f32 %v461, 0.0
  %v522 = vmax.f32 %v466, 0.0
  %v523 = vmax.f32 %v469, 0.0
  %v524 = vmax.f32 %v474, 0.0
  %v525 = vmax.f32 %v477, 0.0
  %v526 = vmax.f32 %v482, 0.0
  %v527 = vmax.f32 %v485, 0.0
  %v528 = vmax.f32 %v490, 0.0
  %v529 = vmax.f32 %v493, 0.0
  %v530 = vmax.f32 %v498, 0.0
  %v531 = vmax.f32 %v501, 0.0
  %v532 = vmax.f32 %v506, 0.0
  %v533 = vmax.f32 %v509, 0.0
  %v534 = vmax.f32 %v514, 0.0
  %v535 = vmax.f32 %v517, 0.0
  %v536 = vand.u32 2147483647, %v458
  %v537 = vand.u32 2147483647, %v461
  %v538 = vand.u32 2147483647, %v466
  %v539 = vand.u32 2147483647, %v469
  %v540 = vand.u32 2147483647, %v474
  %v541 = vand.u32 2147483647, %v477
  %v542 = vand.u32 2147483647, %v482
  %v543 = vand.u32 2147483647, %v485
  %v544 = vand.u32 2147483647, %v490
  %v545 = vand.u32 2147483647, %v493
  %v546 = vand.u32 2147483647, %v498
  %v547 = vand.u32 2147483647, %v501
  %v548 = vand.u32 2147483647, %v506
  %v549 = vand.u32 2147483647, %v509
  %v550 = vand.u32 2147483647, %v514
  %v551 = vand.u32 2147483647, %v517
  %v552 = vsub.f32 0.0, %v536
  %v553 = vsub.f32 0.0, %v537
  %v554 = vsub.f32 0.0, %v538
  %v555 = vsub.f32 0.0, %v539
  %v556 = vsub.f32 0.0, %v540
  %v557 = vsub.f32 0.0, %v541
  %v558 = vsub.f32 0.0, %v542
  %v559 = vsub.f32 0.0, %v543
  %v560 = vsub.f32 0.0, %v544
  %v561 = vsub.f32 0.0, %v545
  %v562 = vsub.f32 0.0, %v546
  %v563 = vsub.f32 0.0, %v547
  %v564 = vsub.f32 0.0, %v548
  %v565 = vsub.f32 0.0, %v549
  %v566 = vsub.f32 0.0, %v550
  %v567 = vsub.f32 0.0, %v551
  %v568 = vmul.f32 %v552, 1.442695
  %v569 = vpow.pop %v568
  %v570 = vmul.f32 %v553, 1.442695
  %v571 = vpow.pop %v570
  %v572 = vmul.f32 %v554, 1.442695
  %v573 = vpow.pop %v572
  %v574 = vmul.f32 %v555, 1.442695
  %v575 = vpow.pop %v574
  %v576 = vmul.f32 %v556, 1.442695
  %v577 = vpow.pop %v576
  %v578 = vmul.f32 %v557, 1.442695
  %v579 = vpow.pop %v578
  %v580 = vmul.f32 %v558, 1.442695
  %v581 = vpow.pop %v580
  %v582 = vmul.f32 %v559, 1.442695
  %v583 = vpow.pop %v582
  %v584 = vmul.f32 %v560, 1.442695
  %v585 = vpow.pop %v584
  %v586 = vmul.f32 %v561, 1.442695
  %v587 = vpow.pop %v586
  %v588 = vmul.f32 %v562, 1.442695
  %v589 = vpow.pop %v588
  %v590 = vmul.f32 %v563, 1.442695
  %v591 = vpow.pop %v590
  %v592 = vmul.f32 %v564, 1.442695
  %v593 = vpow.pop %v592
  %v594 = vmul.f32 %v565, 1.442695
  %v595 = vpow.pop %v594
  %v596 = vmul.f32 %v566, 1.442695
  %v597 = vpow.pop %v596
  %v598 = vmul.f32 %v567, 1.442695
  %v599 = vpow.pop %v598
  %v600 = vadd.f32 %v569, 1.0
  %v601 = vlog2.pop %v600
  %v602 = vmul.f32 %v601, 0.6931472
  %v603 = vmul.f32 -0.5, %v569
  %v604 = vadd.f32 %v603, 1.0
  %v605 = vmul.f32 %v604, %v569
  %v606 = vand.u32 2147483647, %v569
  %vm607 = vcmp.lt.f32.partialorder %v606, 0.0004427343
  %v608 = vsel %vm607, %v605, %v602
  %v609 = vadd.f32 %v571, 1.0
  %v610 = vlog2.pop %v609
  %v611 = vmul.f32 %v610, 0.6931472
  %v612 = vmul.f32 -0.5, %v571
  %v613 = vadd.f32 %v612, 1.0
  %v614 = vmul.f32 %v613, %v571
  %v615 = vand.u32 2147483647, %v571
  %vm616 = vcmp.lt.f32.partialorder %v615, 0.0004427343
  %v617 = vsel %vm616, %v614, %v611
  %v618 = vadd.f32 %v573, 1.0
  %v619 = vlog2.pop %v618
  %v620 = vmul.f32 %v619, 0.6931472
  %v621 = vmul.f32 -0.5, %v573
  %v622 = vadd.f32 %v621, 1.0
  %v623 = vmul.f32 %v622, %v573
  %v624 = vand.u32 2147483647, %v573
  %vm625 = vcmp.lt.f32.partialorder %v624, 0.0004427343
  %v626 = vsel %vm625, %v623, %v620
  %v627 = vadd.f32 %v575, 1.0
  %v628 = vlog2.pop %v627
  %v629 = vmul.f32 %v628, 0.6931472
  %v630 = vmul.f32 -0.5, %v575
  %v631 = vadd.f32 %v630, 1.0
  %v632 = vmul.f32 %v631, %v575
  %v633 = vand.u32 2147483647, %v575
  %vm634 = vcmp.lt.f32.partialorder %v633, 0.0004427343
  %v635 = vsel %vm634, %v632, %v629
  %v636 = vadd.f32 %v577, 1.0
  %v637 = vlog2.pop %v636
  %v638 = vmul.f32 %v637, 0.6931472
  %v639 = vmul.f32 -0.5, %v577
  %v640 = vadd.f32 %v639, 1.0
  %v641 = vmul.f32 %v640, %v577
  %v642 = vand.u32 2147483647, %v577
  %vm643 = vcmp.lt.f32.partialorder %v642, 0.0004427343
  %v644 = vsel %vm643, %v641, %v638
  %v645 = vadd.f32 %v579, 1.0
  %v646 = vlog2.pop %v645
  %v647 = vmul.f32 %v646, 0.6931472
  %v648 = vmul.f32 -0.5, %v579
  %v649 = vadd.f32 %v648, 1.0
  %v650 = vmul.f32 %v649, %v579
  %v651 = vand.u32 2147483647, %v579
  %vm652 = vcmp.lt.f32.partialorder %v651, 0.0004427343
  %v653 = vsel %vm652, %v650, %v647
  %v654 = vadd.f32 %v581, 1.0
  %v655 = vlog2.pop %v654
  %v656 = vmul.f32 %v655, 0.6931472
  %v657 = vmul.f32 -0.5, %v581
  %v658 = vadd.f32 %v657, 1.0
  %v659 = vmul.f32 %v658, %v581
  %v660 = vand.u32 2147483647, %v581
  %vm661 = vcmp.lt.f32.partialorder %v660, 0.0004427343
  %v662 = vsel %vm661, %v659, %v656
  %v663 = vadd.f32 %v583, 1.0
  %v664 = vlog2.pop %v663
  %v665 = vmul.f32 %v664, 0.6931472
  %v666 = vmul.f32 -0.5, %v583
  %v667 = vadd.f32 %v666, 1.0
  %v668 = vmul.f32 %v667, %v583
  %v669 = vand.u32 2147483647, %v583
  %vm670 = vcmp.lt.f32.partialorder %v669, 0.0004427343
  %v671 = vsel %vm670, %v668, %v665
  %v672 = vadd.f32 %v585, 1.0
  %v673 = vlog2.pop %v672
  %v674 = vmul.f32 %v673, 0.6931472
  %v675 = vmul.f32 -0.5, %v585
  %v676 = vadd.f32 %v675, 1.0
  %v677 = vmul.f32 %v676, %v585
  %v678 = vand.u32 2147483647, %v585
  %vm679 = vcmp.lt.f32.partialorder %v678, 0.0004427343
  %v680 = vsel %vm679, %v677, %v674
  %v681 = vadd.f32 %v587, 1.0
  %v682 = vlog2.pop %v681
  %v683 = vmul.f32 %v682, 0.6931472
  %v684 = vmul.f32 -0.5, %v587
  %v685 = vadd.f32 %v684, 1.0
  %v686 = vmul.f32 %v685, %v587
  %v687 = vand.u32 2147483647, %v587
  %vm688 = vcmp.lt.f32.partialorder %v687, 0.0004427343
  %v689 = vsel %vm688, %v686, %v683
  %v690 = vadd.f32 %v589, 1.0
  %v691 = vlog2.pop %v690
  %v692 = vmul.f32 %v691, 0.6931472
  %v693 = vmul.f32 -0.5, %v589
  %v694 = vadd.f32 %v693, 1.0
  %v695 = vmul.f32 %v694, %v589
  %v696 = vand.u32 2147483647, %v589
  %vm697 = vcmp.lt.f32.partialorder %v696, 0.0004427343
  %v698 = vsel %vm697, %v695, %v692
  %v699 = vadd.f32 %v591, 1.0
  %v700 = vlog2.pop %v699
  %v701 = vmul.f32 %v700, 0.6931472
  %v702 = vmul.f32 -0.5, %v591
  %v703 = vadd.f32 %v702, 1.0
  %v704 = vmul.f32 %v703, %v591
  %v705 = vand.u32 2147483647, %v591
  %vm706 = vcmp.lt.f32.partialorder %v705, 0.0004427343
  %v707 = vsel %vm706, %v704, %v701
  %v708 = vadd.f32 %v593, 1.0
  %v709 = vlog2.pop %v708
  %v710 = vmul.f32 %v709, 0.6931472
  %v711 = vmul.f32 -0.5, %v593
  %v712 = vadd.f32 %v711, 1.0
  %v713 = vmul.f32 %v712, %v593
  %v714 = vand.u32 2147483647, %v593
  %vm715 = vcmp.lt.f32.partialorder %v714, 0.0004427343
  %v716 = vsel %vm715, %v713, %v710
  %v717 = vadd.f32 %v595, 1.0
  %v718 = vlog2.pop %v717
  %v719 = vmul.f32 %v718, 0.6931472
  %v720 = vmul.f32 -0.5, %v595
  %v721 = vadd.f32 %v720, 1.0
  %v722 = vmul.f32 %v721, %v595
  %v723 = vand.u32 2147483647, %v595
  %vm724 = vcmp.lt.f32.partialorder %v723, 0.0004427343
  %v725 = vsel %vm724, %v722, %v719
  %v726 = vadd.f32 %v597, 1.0
  %v727 = vlog2.pop %v726
  %v728 = vmul.f32 %v727, 0.6931472
  %v729 = vmul.f32 -0.5, %v597
  %v730 = vadd.f32 %v729, 1.0
  %v731 = vmul.f32 %v730, %v597
  %v732 = vand.u32 2147483647, %v597
  %vm733 = vcmp.lt.f32.partialorder %v732, 0.0004427343
  %v734 = vsel %vm733, %v731, %v728
  %v735 = vadd.f32 %v599, 1.0
  %v736 = vlog2.pop %v735
  %v737 = vmul.f32 %v736, 0.6931472
  %v738 = vmul.f32 -0.5, %v599
  %v739 = vadd.f32 %v738, 1.0
  %v740 = vmul.f32 %v739, %v599
  %v741 = vand.u32 2147483647, %v599
  %vm742 = vcmp.lt.f32.partialorder %v741, 0.0004427343
  %v743 = vsel %vm742, %v740, %v737
  %v744 = vadd.f32 %v520, %v608
  %v745 = vadd.f32 %v521, %v617
  %v746 = vadd.f32 %v522, %v626
  %v747 = vadd.f32 %v523, %v635
  %v748 = vadd.f32 %v524, %v644
  %v749 = vadd.f32 %v525, %v653
  %v750 = vadd.f32 %v526, %v662
  %v751 = vadd.f32 %v527, %v671
  %v752 = vadd.f32 %v528, %v680
  %v753 = vadd.f32 %v529, %v689
  %v754 = vadd.f32 %v530, %v698
  %v755 = vadd.f32 %v531, %v707
  %v756 = vadd.f32 %v532, %v716
  %v757 = vadd.f32 %v533, %v725
  %v758 = vadd.f32 %v534, %v734
  %v759 = vadd.f32 %v535, %v743
  %vm760 = vcmask 64512
  %761 = vst.msk [vmem:[%s5] sm:$0xff] %vm760, %v458
  %762 = vst.msk [vmem:[%s5 + $0x8] sm:$0xff] %vm760, %v461
  %763 = vst.msk [vmem:[%s5 + $0x10] sm:$0xff] %vm760, %v466
  %764 = vst.msk [vmem:[%s5 + $0x18] sm:$0xff] %vm760, %v469
  %765 = vst.msk [vmem:[%s5 + $0x20] sm:$0xff] %vm760, %v474
  %766 = vst.msk [vmem:[%s5 + $0x28] sm:$0xff] %vm760, %v477
  %767 = vst.msk [vmem:[%s5 + $0x30] sm:$0xff] %vm760, %v482
  %768 = vst.msk [vmem:[%s5 + $0x38] sm:$0xff] %vm760, %v485
  %769 = vst.msk [vmem:[%s5 + $0x40] sm:$0xff] %vm760, %v490
  %770 = vst.msk [vmem:[%s5 + $0x48] sm:$0xff] %vm760, %v493
  %771 = vst.msk [vmem:[%s5 + $0x50] sm:$0xff] %vm760, %v498
  %772 = vst.msk [vmem:[%s5 + $0x58] sm:$0xff] %vm760, %v501
  %773 = vst.msk [vmem:[%s5 + $0x60] sm:$0xff] %vm760, %v506
  %774 = vst.msk [vmem:[%s5 + $0x68] sm:$0xff] %vm760, %v509
  %775 = vst.msk [vmem:[%s5 + $0x70] sm:$0xff] %vm760, %v514
  %776 = vst.msk [vmem:[%s5 + $0x78] sm:$0xff] %vm760, %v517
  %v777 = vmul.f32 %v744, %v744
  %v778 = vmul.f32 %v745, %v745
  %v779 = vmul.f32 %v746, %v746
  %v780 = vmul.f32 %v747, %v747
  %v781 = vmul.f32 %v748, %v748
  %v782 = vmul.f32 %v749, %v749
  %v783 = vmul.f32 %v750, %v750
  %v784 = vmul.f32 %v751, %v751
  %v785 = vmul.f32 %v752, %v752
  %v786 = vmul.f32 %v753, %v753
  %v787 = vmul.f32 %v754, %v754
  %v788 = vmul.f32 %v755, %v755
  %v789 = vmul.f32 %v756, %v756
  %v790 = vmul.f32 %v757, %v757
  %v791 = vmul.f32 %v758, %v758
  %v792 = vmul.f32 %v759, %v759
  %809 = vrot.lane.b32.xlu0 %v777, 120
  %v810 = vpop.permute.xlu0 %809
  %811 = vrot.lane.b32.xlu0 %v778, 120
  %v812 = vpop.permute.xlu0 %811
  %813 = vrot.lane.b32.xlu0 %v779, 120
  %v814 = vpop.permute.xlu0 %813
  %815 = vrot.lane.b32.xlu0 %v780, 120
  %v816 = vpop.permute.xlu0 %815
  %817 = vrot.lane.b32.xlu0 %v781, 120
  %v818 = vpop.permute.xlu0 %817
  %819 = vrot.lane.b32.xlu0 %v782, 120
  %v820 = vpop.permute.xlu0 %819
  %821 = vrot.lane.b32.xlu0 %v783, 120
  %v822 = vpop.permute.xlu0 %821
  %823 = vrot.lane.b32.xlu0 %v784, 120
  %v824 = vpop.permute.xlu0 %823
  %825 = vrot.lane.b32.xlu0 %v785, 120
  %v826 = vpop.permute.xlu0 %825
  %827 = vrot.lane.b32.xlu0 %v786, 120
  %v828 = vpop.permute.xlu0 %827
  %829 = vrot.lane.b32.xlu0 %v787, 120
  %v830 = vpop.permute.xlu0 %829
  %831 = vrot.lane.b32.xlu0 %v788, 120
  %v832 = vpop.permute.xlu0 %831
  %833 = vrot.lane.b32.xlu0 %v789, 120
  %v834 = vpop.permute.xlu0 %833
  %835 = vrot.lane.b32.xlu0 %v790, 120
  %v836 = vpop.permute.xlu0 %835
  %837 = vrot.lane.b32.xlu0 %v791, 120
  %v838 = vpop.permute.xlu0 %837
  %839 = vrot.lane.b32.xlu0 %v792, 120
  %v840 = vpop.permute.xlu0 %839
  %857 = vst.msk [vmem:[%s6] sm:$0xff] %vm760, %v810
  %858 = vst.msk [vmem:[%s6 + $0x8] sm:$0xff] %vm760, %v812
  %859 = vst.msk [vmem:[%s6 + $0x10] sm:$0xff] %vm760, %v814
  %860 = vst.msk [vmem:[%s6 + $0x18] sm:$0xff] %vm760, %v816
  %861 = vst.msk [vmem:[%s6 + $0x20] sm:$0xff] %vm760, %v818
  %862 = vst.msk [vmem:[%s6 + $0x28] sm:$0xff] %vm760, %v820
  %863 = vst.msk [vmem:[%s6 + $0x30] sm:$0xff] %vm760, %v822
  %864 = vst.msk [vmem:[%s6 + $0x38] sm:$0xff] %vm760, %v824
  %865 = vst.msk [vmem:[%s6 + $0x40] sm:$0xff] %vm760, %v826
  %866 = vst.msk [vmem:[%s6 + $0x48] sm:$0xff] %vm760, %v828
  %867 = vst.msk [vmem:[%s6 + $0x50] sm:$0xff] %vm760, %v830
  %868 = vst.msk [vmem:[%s6 + $0x58] sm:$0xff] %vm760, %v832
  %869 = vst.msk [vmem:[%s6 + $0x60] sm:$0xff] %vm760, %v834
  %870 = vst.msk [vmem:[%s6 + $0x68] sm:$0xff] %vm760, %v836
  %871 = vst.msk [vmem:[%s6 + $0x70] sm:$0xff] %vm760, %v838
  %872 = vst.msk [vmem:[%s6 + $0x78] sm:$0xff] %vm760, %v840
  // Predicated region
  $region22: #{tpu_custom_call.1} parent=0 // pred_check
    _
  $region23: #{tpu_custom_call.1} parent=0 // pred_check_branch
    %874 = sbr.rel (0) target = $region25
  $region24: #{tpu_custom_call.1} parent=0 // pred_region
    _
  $region25: #{tpu_custom_call.1} parent=0 // pred_fallthru
    _
  // Predicated region
  $region26: #{tpu_custom_call.1} parent=0 // pred_check
    _
  $region27: #{tpu_custom_call.1} parent=0 // pred_check_branch
    %876 = sbr.rel (0) target = $region29
  $region28: #{tpu_custom_call.1} parent=0 // pred_region
    _
  $region29: #{tpu_custom_call.1} parent=0 // pred_fallthru
    _
  // Predicated region
  $region30: #{tpu_custom_call.1} parent=0 // pred_check
    _
  $region31: #{tpu_custom_call.1} parent=0 // pred_check_branch
    %878 = sbr.rel (0) target = $region33
  $region32: #{tpu_custom_call.1} parent=0 // pred_region
    _
  $region33: #{tpu_custom_call.1} parent=0 // pred_fallthru
    _
  // Predicated region
  $region34: #{tpu_custom_call.1} parent=0 // pred_check
    _
  $region35: #{tpu_custom_call.1} parent=0 // pred_check_branch
    %880 = sbr.rel (0) target = $region37
  $region36: #{tpu_custom_call.1} parent=0 // pred_region
    _
  $region37: #{tpu_custom_call.1} parent=0 // pred_fallthru
    _

</llo_original>
